<compile_context>
chip_gen: v5e
topology: v5e:2x2
jax: 0.10.0
libtpu: 0.0.40
codegen_flags: <defaults>
</compile_context>

<pallas_src>
import jax
import jax.numpy as jnp
from jax.experimental import pallas as pl
from jax.experimental.pallas import tpu as pltpu

HIDDEN = 512
LANE = 128
SUBLANE = 8
MAX_TM = 1024


def _round_up(x, m):
    return (x + m - 1) // m * m


def _choose_tm(batch, input_dim, x_itemsize):
    """Pick the batch tile size (rows per grid step)."""
    if batch <= 256:
        # Single tile. A block equal to the full batch dim is always legal, so no
        # padding of x is needed even for odd / tiny batch sizes.
        return batch
    # >= 2 tiles so both v7x TensorCores get work; 256-aligned for the MXU (v6e);
    # capped at MAX_TM so per-grid-step overhead is amortized at large batch.
    half = pl.cdiv(batch, 2)
    tm = _round_up(half, 256) if half >= 256 else _round_up(half, SUBLANE)
    tm = min(tm, MAX_TM)
    # Keep the double-buffered x tile modest so very wide inputs still fit VMEM.
    while tm > 256 and 2 * tm * input_dim * x_itemsize > 16 * 1024 * 1024:
        tm = _round_up(tm // 2, SUBLANE)
    return tm


def mlp_kernel(x_ref, w1_ref, w2_ref, w3_ref, bias_ref, o_ref):
    out_dim = o_ref.shape[-1]
    out_pad = w3_ref.shape[-1]

    # Input tile (f32 or bf16) -> bf16 on the MXU feed path; accumulation in f32.
    x = x_ref[...].astype(jnp.bfloat16)

    b1 = bias_ref[:, 0:HIDDEN]
    b2 = bias_ref[:, HIDDEN:2 * HIDDEN]
    b3 = bias_ref[:, 2 * HIDDEN:2 * HIDDEN + out_pad]

    h1 = jnp.dot(x, w1_ref[...], preferred_element_type=jnp.float32) + b1
    h2 = jnp.dot(h1.astype(jnp.bfloat16), w2_ref[...],
                 preferred_element_type=jnp.float32) + b2
    out = jnp.dot(h2.astype(jnp.bfloat16), w3_ref[...],
                  preferred_element_type=jnp.float32) + b3
    # Lane-padded matmul result -> true out_dim store. The block's last dim equals
    # the full array dim so this is legal; the narrow masked store per tile is
    # negligible vs. the 16x write amplification + extra slice pass it removes.
    o_ref[...] = out[:, :out_dim].astype(o_ref.dtype)


def network_forward(state, params, out_dim):
    """state: (batch, input_dim), f32 (or bf16 if the producer emits it for free).
    params: dict from init_params.  Returns (batch, out_dim) f32."""
    w1, w2, w3p, bias = params["w1"], params["w2"], params["w3p"], params["bias"]
    batch, input_dim = state.shape
    out_pad = w3p.shape[1]

    x_itemsize = state.dtype.itemsize
    tm = _choose_tm(batch, input_dim, x_itemsize)
    grid = (pl.cdiv(batch, tm),)

    flops = 2 * batch * (input_dim * HIDDEN + HIDDEN * HIDDEN + HIDDEN * out_pad)
    bytes_accessed = (state.size * x_itemsize
                      + (w1.size + w2.size + w3p.size) * 2
                      + bias.size * 4
                      + batch * out_dim * 4)

    # Explicit VMEM budget: x/out tiles (double-buffered), resident bf16 weights
    # (double-buffered by default -- pl.Buffered(1) on their specs would halve this
    # on v7x, but saves <1 MiB here), f32 h1/h2 temporaries, plus slack.
    vmem_est = (2 * tm * input_dim * x_itemsize
                + 2 * tm * out_dim * 4
                + 2 * (w1.size + w2.size + w3p.size) * 2
                + 2 * bias.size * 4
                + 6 * tm * HIDDEN * 4)
    vmem_limit = int(min(56 * 1024 * 1024,
                         max(24 * 1024 * 1024, (vmem_est * 3) // 2)))

    return pl.pallas_call(
        mlp_kernel,
        out_shape=jax.ShapeDtypeStruct((batch, out_dim), jnp.float32),
        grid_spec=pltpu.PrefetchScalarGridSpec(
            num_scalar_prefetch=0,
            grid=grid,
            in_specs=[
                # x tile marches with the grid; ragged last tile is clipped by Pallas.
                pl.BlockSpec((tm, input_dim), lambda i: (i, 0)),
                # Weights + packed bias: constant index_map -> VMEM-resident.
                pl.BlockSpec((input_dim, HIDDEN), lambda i: (0, 0)),
                pl.BlockSpec((HIDDEN, HIDDEN), lambda i: (0, 0)),
                pl.BlockSpec((HIDDEN, out_pad), lambda i: (0, 0)),
                pl.BlockSpec((1, 2 * HIDDEN + out_pad), lambda i: (0, 0)),
            ],
            out_specs=pl.BlockSpec((tm, out_dim), lambda i: (i, 0)),
        ),
        compiler_params=pltpu.CompilerParams(
            dimension_semantics=("parallel",),
            vmem_limit_bytes=vmem_limit),
        cost_estimate=pl.CostEstimate(
            flops=flops, transcendentals=0, bytes_accessed=bytes_accessed),
    )(state, w1, w2, w3p, bias)


def init_params(key, input_dim, output_dim):
    """Deterministic init mimicking nn.Linear's U(-1/sqrt(fan_in), 1/sqrt(fan_in)).
    Kernel weights are stored as (in, out) = transpose of the PyTorch layout, cast
    to bf16 (optionally int8 on v5e/v6e or fp8 on v7x if the accuracy budget allows;
    not done here).  fc3's weight is zero-padded to a lane-dense (512, out_pad); the
    three biases are packed into one (1, 512+512+out_pad) f32 row (one DMA).
    Returns (kernel_params, f32_reference_params)."""
    out_pad = _round_up(max(output_dim, LANE), LANE)
    ks = jax.random.split(key, 6)

    def linear(kw, kb, fan_in, fan_out):
        bound = 1.0 / (fan_in ** 0.5)
        w = jax.random.uniform(kw, (fan_in, fan_out), jnp.float32, -bound, bound)
        b = jax.random.uniform(kb, (1, fan_out), jnp.float32, -bound, bound)
        return w, b

    w1, b1 = linear(ks[0], ks[1], input_dim, HIDDEN)
    w2, b2 = linear(ks[2], ks[3], HIDDEN, HIDDEN)
    w3, b3 = linear(ks[4], ks[5], HIDDEN, output_dim)

    w3p = jnp.zeros((HIDDEN, out_pad), jnp.float32).at[:, :output_dim].set(w3)
    b3p = jnp.zeros((1, out_pad), jnp.float32).at[:, :output_dim].set(b3)
    bias = jnp.concatenate([b1, b2, b3p], axis=1)  # (1, 512+512+out_pad), f32

    kernel_params = {
        "w1": w1.astype(jnp.bfloat16),
        "w2": w2.astype(jnp.bfloat16),
        "w3p": w3p.astype(jnp.bfloat16),
        "bias": bias,
    }
    ref_params = {"w1": w1, "b1": b1, "w2": w2, "b2": b2, "w3": w3, "b3": b3}
    return kernel_params, ref_params


if __name__ == "__main__":
    key = jax.random.PRNGKey(0)
    k_params, k_state = jax.random.split(key)

    input_dim, output_dim, batch = 32, 8, 2
    params, ref_params = init_params(k_params, input_dim, output_dim)
    state = jax.random.normal(k_state, (batch, input_dim), jnp.float32)

    out = network_forward(state, params, output_dim)
    jax.block_until_ready(out)

    # True f32 reference matching the PyTorch module's forward (non-circular check:
    # the kernel uses bf16 weights/activations with f32 accumulation, the reference
    # is pure f32).
    h1 = state @ ref_params["w1"] + ref_params["b1"]
    h2 = h1 @ ref_params["w2"] + ref_params["b2"]
    ref = h2 @ ref_params["w3"] + ref_params["b3"]

    assert out.shape == (batch, output_dim)
    max_err = jnp.max(jnp.abs(out - ref))
    assert jnp.allclose(out, ref, atol=2e-2, rtol=2e-2), f"max abs err {max_err}"

    print("KERNEL_OK")
</pallas_src>

<mosaic_0001>
module attributes {stable_mosaic.version = 11 : i64} {
  func.func @mlp_kernel(%arg0: i32, %arg1: memref<2x32xf32, #tpu.memory_space<vmem>>, %arg2: memref<32x512xbf16, #tpu.memory_space<vmem>>, %arg3: memref<512x512xbf16, #tpu.memory_space<vmem>>, %arg4: memref<512x128xbf16, #tpu.memory_space<vmem>>, %arg5: memref<1x1152xf32, #tpu.memory_space<vmem>>, %arg6: memref<2x8xf32, #tpu.memory_space<vmem>>) attributes {dimension_semantics = [#tpu.dimension_semantics<parallel>], iteration_bounds = array<i64: 1>, scalar_prefetch = 0 : i64, scratch_operands = 0 : i64, tpu.core_type = #tpu.core_type<tc>, window_params = [{transform_indices = @transform_0, window_bounds = array<i64: 2, 32>}, {pipeline_mode = #tpu.pipeline_mode<synchronous>, transform_indices = @transform_1, window_bounds = array<i64: 32, 512>}, {pipeline_mode = #tpu.pipeline_mode<synchronous>, transform_indices = @transform_2, window_bounds = array<i64: 512, 512>}, {pipeline_mode = #tpu.pipeline_mode<synchronous>, transform_indices = @transform_3, window_bounds = array<i64: 512, 128>}, {pipeline_mode = #tpu.pipeline_mode<synchronous>, transform_indices = @transform_4, window_bounds = array<i64: 1, 1152>}, {transform_indices = @transform_5, window_bounds = array<i64: 2, 8>}]} {
    %c0 = arith.constant 0 : index
    %c0_0 = arith.constant 0 : index
    %0 = vector.load %arg1[%c0, %c0_0] : memref<2x32xf32, #tpu.memory_space<vmem>>, vector<2x32xf32>
    %1 = arith.truncf %0 : vector<2x32xf32> to vector<2x32xbf16>
    %c0_1 = arith.constant 0 : index
    %c0_2 = arith.constant 0 : index
    %2 = vector.load %arg5[%c0_1, %c0_2] : memref<1x1152xf32, #tpu.memory_space<vmem>>, vector<1x512xf32>
    %c0_3 = arith.constant 0 : index
    %c512 = arith.constant 512 : index
    %3 = vector.load %arg5[%c0_3, %c512] : memref<1x1152xf32, #tpu.memory_space<vmem>>, vector<1x512xf32>
    %c0_4 = arith.constant 0 : index
    %c1024 = arith.constant 1024 : index
    %4 = vector.load %arg5[%c0_4, %c1024] : memref<1x1152xf32, #tpu.memory_space<vmem>>, vector<1x128xf32>
    %c0_5 = arith.constant 0 : index
    %c0_6 = arith.constant 0 : index
    %5 = vector.load %arg2[%c0_5, %c0_6] : memref<32x512xbf16, #tpu.memory_space<vmem>>, vector<32x512xbf16>
    %cst = arith.constant dense<0.000000e+00> : vector<2x512xf32>
    %6 = tpu.matmul %1, %5, %cst {dimension_numbers = #tpu.dot_dimension_numbers<[1], [0], [0], [1], [0, 0, 1, 1], [], []>} : vector<2x32xbf16>, vector<32x512xbf16>, vector<2x512xf32> -> vector<2x512xf32>
    %7 = vector.broadcast %2 : vector<1x512xf32> to vector<2x512xf32>
    %8 = arith.addf %6, %7 : vector<2x512xf32>
    %9 = arith.truncf %8 : vector<2x512xf32> to vector<2x512xbf16>
    %c0_7 = arith.constant 0 : index
    %c0_8 = arith.constant 0 : index
    %10 = vector.load %arg3[%c0_7, %c0_8] : memref<512x512xbf16, #tpu.memory_space<vmem>>, vector<512x512xbf16>
    %cst_9 = arith.constant dense<0.000000e+00> : vector<2x512xf32>
    %11 = tpu.matmul %9, %10, %cst_9 {dimension_numbers = #tpu.dot_dimension_numbers<[1], [0], [0], [1], [0, 0, 1, 1], [], []>} : vector<2x512xbf16>, vector<512x512xbf16>, vector<2x512xf32> -> vector<2x512xf32>
    %12 = vector.broadcast %3 : vector<1x512xf32> to vector<2x512xf32>
    %13 = arith.addf %11, %12 : vector<2x512xf32>
    %14 = arith.truncf %13 : vector<2x512xf32> to vector<2x512xbf16>
    %c0_10 = arith.constant 0 : index
    %c0_11 = arith.constant 0 : index
    %15 = vector.load %arg4[%c0_10, %c0_11] : memref<512x128xbf16, #tpu.memory_space<vmem>>, vector<512x128xbf16>
    %cst_12 = arith.constant dense<0.000000e+00> : vector<2x128xf32>
    %16 = tpu.matmul %14, %15, %cst_12 {dimension_numbers = #tpu.dot_dimension_numbers<[1], [0], [0], [1], [0, 0, 1, 1], [], []>} : vector<2x512xbf16>, vector<512x128xbf16>, vector<2x128xf32> -> vector<2x128xf32>
    %17 = vector.broadcast %4 : vector<1x128xf32> to vector<2x128xf32>
    %18 = arith.addf %16, %17 : vector<2x128xf32>
    %19 = vector.extract_strided_slice %18 {offsets = [0, 0], sizes = [2, 8], strides = [1, 1]} : vector<2x128xf32> to vector<2x8xf32>
    %c0_13 = arith.constant 0 : index
    %c0_14 = arith.constant 0 : index
    %20 = vector.load %arg6[%c0_13, %c0_14] : memref<2x8xf32, #tpu.memory_space<vmem>>, vector<2x8xf32>
    tpu.vector_store %arg6[%c0_13, %c0_14], %19 {strides = array<i32>} : memref<2x8xf32, #tpu.memory_space<vmem>>, vector<2x8xf32>,
    return
  }
  func.func @transform_0(%arg0: i32) -> (i32, i32) {
    %c0_i32 = arith.constant 0 : i32
    %c0_i32_0 = arith.constant 0 : i32
    return %arg0, %c0_i32 : i32, i32
  }
  func.func @transform_1(%arg0: i32) -> (i32, i32) {
    %c0_i32 = arith.constant 0 : i32
    %c0_i32_0 = arith.constant 0 : i32
    %c0_i32_1 = arith.constant 0 : i32
    return %c0_i32, %c0_i32_0 : i32, i32
  }
  func.func @transform_2(%arg0: i32) -> (i32, i32) {
    %c0_i32 = arith.constant 0 : i32
    %c0_i32_0 = arith.constant 0 : i32
    %c0_i32_1 = arith.constant 0 : i32
    return %c0_i32, %c0_i32_0 : i32, i32
  }
  func.func @transform_3(%arg0: i32) -> (i32, i32) {
    %c0_i32 = arith.constant 0 : i32
    %c0_i32_0 = arith.constant 0 : i32
    %c0_i32_1 = arith.constant 0 : i32
    return %c0_i32, %c0_i32_0 : i32, i32
  }
  func.func @transform_4(%arg0: i32) -> (i32, i32) {
    %c0_i32 = arith.constant 0 : i32
    %c0_i32_0 = arith.constant 0 : i32
    %c0_i32_1 = arith.constant 0 : i32
    return %c0_i32, %c0_i32_0 : i32, i32
  }
  func.func @transform_5(%arg0: i32) -> (i32, i32) {
    %c0_i32 = arith.constant 0 : i32
    %c0_i32_0 = arith.constant 0 : i32
    return %arg0, %c0_i32 : i32, i32
  }
}

</mosaic_0001>

<llo_original>
// kernel: tpu_custom_call.1
$region0: #{tpu_custom_call.1}
  #allocation0 [shape = 'u32[]', space=smem, size = 0x4, offset = 0x4, fixed_abs, tag = 'smem constant byte address 0x4 - core index']
  #allocation1 [shape = 'u32[72,128]{1,0:T(1,128)}', space=vmem, size = 0x9000, scoped, tag = 'internal scratch']
  %s0 = inlined_call_operand.hbm [shape: f32[2,32], index: 0, kind: input, shape index: {}]
  %s1 = inlined_call_operand.hbm [shape: bf16[32,512], index: 1, kind: input, shape index: {}]
  %s2 = inlined_call_operand.hbm [shape: bf16[512,512], index: 2, kind: input, shape index: {}]
  %s3 = inlined_call_operand.hbm [shape: bf16[512,128], index: 3, kind: input, shape index: {}]
  %s4 = inlined_call_operand.hbm [shape: f32[1,1152], index: 4, kind: input, shape index: {}]
  %s5 = inlined_call_operand.hbm [shape: f32[2,8], index: 5, kind: output, shape index: {}]
  %s6 = sld [smem:[#allocation0]]
  $region50: #{tpu_custom_call.1} parent=0
    _
  %s8 = ssub.s32 1, %s6
  %s9 = scalar_select 0, %s8, %s6
  $region1: #{tpu_custom_call.1} parent=0
    #allocation2 [shape = 'u8[1024]{0}', space=vmem, size = 0x400, scoped, tag = 'input window, operand 0, single buffered']
    #allocation3 [shape = 's32[1]{0}', space=sflag, size = 0x4, scoped, tag = 'scoped memory for tpu_custom_call.1']
    #allocation4 [shape = 's32[1]{0}', space=sflag, size = 0x4, scoped, tag = 'scoped memory for tpu_custom_call.1']
    #allocation5 [shape = 'u8[32768]{0}', space=vmem, size = 0x8000, scoped, tag = 'input window, operand 1, single buffered']
    #allocation6 [shape = 's32[1]{0}', space=sflag, size = 0x4, scoped, tag = 'scoped memory for tpu_custom_call.1']
    #allocation7 [shape = 'u8[524288]{0}', space=vmem, size = 0x80000, scoped, tag = 'input window, operand 2, single buffered']
    #allocation8 [shape = 'u8[131072]{0}', space=vmem, size = 0x20000, scoped, tag = 'input window, operand 3, single buffered']
    #allocation9 [shape = 's32[1]{0}', space=sflag, size = 0x4, scoped, tag = 'scoped memory for tpu_custom_call.1']
    #allocation10 [shape = 'u8[4608]{0}', space=vmem, size = 0x1400, scoped, tag = 'input window, operand 4, single buffered']
    #allocation11 [shape = 'u8[1024]{0}', space=vmem, size = 0x400, scoped, tag = 'output window, operand 0, single buffered']
    %10 = vsyncpa [#allocation3], 0
    %11 = vsyncpa [#allocation6], 0
    %12 = vsyncpa [#allocation9], 0
    %13 = vsyncpa [#allocation4], 0
    // Predicated region
    $region2: #{tpu_custom_call.1} parent=1 // pred_check
      _
    $region3: #{tpu_custom_call.1} parent=1 // pred_check_branch
      %15 = sbr.rel (0) target = $region5
    $region4: #{tpu_custom_call.1} parent=1 // pred_region
      %17 = vsyncadd [#allocation3], 0
      %s19 = sshll.u32 %s0, 4
      %s20 = int_to_ptr.hbm [resolvable:$true] %s19
      %s21 = sshll.u32 [#allocation2], 4
      %s22 = int_to_ptr.vmem [resolvable:$true] %s21
      %24 = dma.hbm_to_vmem [thread:$0]  %s20, 32, %s22, [#allocation3]
    $region5: #{tpu_custom_call.1} parent=1 // pred_fallthru
      _
    // Predicated region
    $region6: #{tpu_custom_call.1} parent=1 // pred_check
      _
    $region7: #{tpu_custom_call.1} parent=1 // pred_check_branch
      %26 = sbr.rel (0) target = $region9
    $region8: #{tpu_custom_call.1} parent=1 // pred_region
      %28 = vsyncadd [#allocation6], 0
      %s29 = sshll.u32 %s1, 4
      %s30 = int_to_ptr.hbm [resolvable:$true] %s29
      %s31 = sshll.u32 [#allocation5], 4
      %s32 = int_to_ptr.vmem [resolvable:$true] %s31
      %37 = dma.hbm_to_vmem [thread:$0]  %s30, 1024, %s32, [#allocation6], 256, 256, 16
    $region9: #{tpu_custom_call.1} parent=1 // pred_fallthru
      _
    // Predicated region
    $region10: #{tpu_custom_call.1} parent=1 // pred_check
      _
    $region11: #{tpu_custom_call.1} parent=1 // pred_check_branch
      %39 = sbr.rel (0) target = $region13
    $region12: #{tpu_custom_call.1} parent=1 // pred_region
      %41 = vsyncadd [#allocation6], 0
      %s42 = sshll.u32 %s2, 4
      %s43 = int_to_ptr.hbm [resolvable:$true] %s42
      %s44 = sshll.u32 [#allocation7], 4
      %s45 = int_to_ptr.vmem [resolvable:$true] %s44
      %50 = dma.hbm_to_vmem [thread:$0]  %s43, 16384, %s45, [#allocation6], 256, 256, 16
    $region13: #{tpu_custom_call.1} parent=1 // pred_fallthru
      _
    // Predicated region
    $region14: #{tpu_custom_call.1} parent=1 // pred_check
      _
    $region15: #{tpu_custom_call.1} parent=1 // pred_check_branch
      %52 = sbr.rel (0) target = $region17
    $region16: #{tpu_custom_call.1} parent=1 // pred_region
      %54 = vsyncadd [#allocation9], 0
      %s55 = sshll.u32 %s3, 4
      %s56 = int_to_ptr.hbm [resolvable:$true] %s55
      %s57 = sshll.u32 [#allocation8], 4
      %s58 = int_to_ptr.vmem [resolvable:$true] %s57
      %63 = dma.hbm_to_vmem [thread:$0]  %s56, 4096, %s58, [#allocation9], 64, 64, 4
    $region17: #{tpu_custom_call.1} parent=1 // pred_fallthru
      _
    // Predicated region
    $region18: #{tpu_custom_call.1} parent=1 // pred_check
      _
    $region19: #{tpu_custom_call.1} parent=1 // pred_check_branch
      %65 = sbr.rel (0) target = $region21
    $region20: #{tpu_custom_call.1} parent=1 // pred_region
      %67 = vsyncadd [#allocation9], 0
      %s69 = sshll.u32 %s4, 4
      %s70 = int_to_ptr.hbm [resolvable:$true] %s69
      %s71 = sshll.u32 [#allocation10], 4
      %s72 = int_to_ptr.vmem [resolvable:$true] %s71
      %74 = dma.hbm_to_vmem [thread:$0]  %s70, 144, %s72, [#allocation9]
    $region21: #{tpu_custom_call.1} parent=1 // pred_fallthru
      _
    // Predicated region
    $region22: #{tpu_custom_call.1} parent=1 // pred_check
      _
    $region23: #{tpu_custom_call.1} parent=1 // pred_check_branch
      %76 = sbr.rel (0) target = $region25
    $region24: #{tpu_custom_call.1} parent=1 // pred_region
      %78 = dma.done [#allocation3], 32
    $region25: #{tpu_custom_call.1} parent=1 // pred_fallthru
      _
    // Predicated region
    $region26: #{tpu_custom_call.1} parent=1 // pred_check
      _
    $region27: #{tpu_custom_call.1} parent=1 // pred_check_branch
      %80 = sbr.rel (0) target = $region29
    $region28: #{tpu_custom_call.1} parent=1 // pred_region
      %82 = dma.done [#allocation6], 1024
    $region29: #{tpu_custom_call.1} parent=1 // pred_fallthru
      _
    // Predicated region
    $region30: #{tpu_custom_call.1} parent=1 // pred_check
      _
    $region31: #{tpu_custom_call.1} parent=1 // pred_check_branch
      %84 = sbr.rel (0) target = $region33
    $region32: #{tpu_custom_call.1} parent=1 // pred_region
      %86 = dma.done [#allocation6], 16384
    $region33: #{tpu_custom_call.1} parent=1 // pred_fallthru
      _
    // Predicated region
    $region34: #{tpu_custom_call.1} parent=1 // pred_check
      _
    $region35: #{tpu_custom_call.1} parent=1 // pred_check_branch
      %88 = sbr.rel (0) target = $region37
    $region36: #{tpu_custom_call.1} parent=1 // pred_region
      %90 = dma.done [#allocation9], 4096
    $region37: #{tpu_custom_call.1} parent=1 // pred_fallthru
      _
    // Predicated region
    $region38: #{tpu_custom_call.1} parent=1 // pred_check
      _
    $region39: #{tpu_custom_call.1} parent=1 // pred_check_branch
      %92 = sbr.rel (0) target = $region41
    $region40: #{tpu_custom_call.1} parent=1 // pred_region
      %94 = dma.done [#allocation9], 144
    $region41: #{tpu_custom_call.1} parent=1 // pred_fallthru
      _
    %v96 = vld [vmem:[#allocation2] sm:$0x3]
    %v97 = vpack.c.bf16 %v96, %v96
    %v98 = vld [vmem:[#allocation10] sm:$0xf]
    %v99 = vld [vmem:[#allocation10 + $0x4] sm:$0xf]
    %v100 = vld [vmem:[#allocation10 + $0x8] sm:$0x1]
    %v101 = vld [vmem:[#allocation5] sm:$0xff]
    %v102 = vld [vmem:[#allocation5 + $0x8] sm:$0xff]
    %v103 = vld [vmem:[#allocation5 + $0x10] sm:$0xff]
    %v104 = vld [vmem:[#allocation5 + $0x18] sm:$0xff]
    %v105 = vld [vmem:[#allocation5 + $0x20] sm:$0xff]
    %v106 = vld [vmem:[#allocation5 + $0x28] sm:$0xff]
    %v107 = vld [vmem:[#allocation5 + $0x30] sm:$0xff]
    %v108 = vld [vmem:[#allocation5 + $0x38] sm:$0xff]
    %v110 = vperm.slane %v98, 0
    %v111 = vperm.slane %v98, 1
    %v112 = vperm.slane %v98, 2
    %v113 = vperm.slane %v98, 3
    %v126 = vunpack.c.l.b16 %v101
    %v127 = vunpack.c.h.b16 %v101
    %v128 = vunpack.c.l.b16 %v102
    %v129 = vunpack.c.h.b16 %v102
    %v130 = vunpack.c.l.b16 %v103
    %v131 = vunpack.c.h.b16 %v103
    %v132 = vunpack.c.l.b16 %v104
    %v133 = vunpack.c.h.b16 %v104
    %v134 = vunpack.c.l.b16 %v105
    %v135 = vunpack.c.h.b16 %v105
    %v136 = vunpack.c.l.b16 %v106
    %v137 = vunpack.c.h.b16 %v106
    %v138 = vunpack.c.l.b16 %v107
    %v139 = vunpack.c.h.b16 %v107
    %v140 = vunpack.c.l.b16 %v108
    %v141 = vunpack.c.h.b16 %v108
    %v142 = vpack.c.b16 %v130, %v126
    %v143 = vpack.c.b16 %v131, %v127
    %v144 = vpack.c.b16 %v132, %v128
    %v145 = vpack.c.b16 %v133, %v129
    %v146 = vpack.c.b16 %v138, %v134
    %v147 = vpack.c.b16 %v139, %v135
    %v148 = vpack.c.b16 %v140, %v136
    %v149 = vpack.c.b16 %v141, %v137
    %vm158 = vcmask 261120
    %v160 = vsel %vm158, %v97, 0
    %162 = vmatpush.bf16.msra.mxu0 0
    %163 = vmatpush.bf16.msra.mxu0 0
    %164 = vmatpush.bf16.msra.mxu0 0
    %165 = vmatpush.bf16.msra.mxu0 0
    %166 = vmatpush.bf16.msra.mxu0 0
    %167 = vmatpush.bf16.msra.mxu0 0
    %168 = vmatpush.bf16.msra.mxu0 %v146
    %169 = vmatpush.bf16.msra.mxu0 %v142
    %170 = vmatmul.bf16.gmra.mxu0 %v160
    %v171 = vpop.f32.mrf.mxu0
    %v172 = vadd.f32 %v110, %v171
    %v173 = vpop.f32.mrf.mxu0
    %174 = vdwg.mxu0
    %175 = vmatpush.bf16.msra.mxu0 0
    %176 = vmatpush.bf16.msra.mxu0 0
    %177 = vmatpush.bf16.msra.mxu0 0
    %178 = vmatpush.bf16.msra.mxu0 0
    %179 = vmatpush.bf16.msra.mxu0 0
    %180 = vmatpush.bf16.msra.mxu0 0
    %181 = vmatpush.bf16.msra.mxu0 %v147
    %182 = vmatpush.bf16.msra.mxu0 %v143
    %183 = vmatmul.bf16.gmra.mxu0 %v160
    %v184 = vpop.f32.mrf.mxu0
    %v185 = vadd.f32 %v111, %v184
    %v186 = vpop.f32.mrf.mxu0
    %187 = vdwg.mxu0
    %188 = vmatpush.bf16.msra.mxu0 0
    %189 = vmatpush.bf16.msra.mxu0 0
    %190 = vmatpush.bf16.msra.mxu0 0
    %191 = vmatpush.bf16.msra.mxu0 0
    %192 = vmatpush.bf16.msra.mxu0 0
    %193 = vmatpush.bf16.msra.mxu0 0
    %194 = vmatpush.bf16.msra.mxu0 %v148
    %195 = vmatpush.bf16.msra.mxu0 %v144
    %196 = vmatmul.bf16.gmra.mxu0 %v160
    %v197 = vpop.f32.mrf.mxu0
    %v198 = vadd.f32 %v112, %v197
    %v199 = vpop.f32.mrf.mxu0
    %200 = vdwg.mxu0
    %201 = vmatpush.bf16.msra.mxu0 0
    %202 = vmatpush.bf16.msra.mxu0 0
    %203 = vmatpush.bf16.msra.mxu0 0
    %204 = vmatpush.bf16.msra.mxu0 0
    %205 = vmatpush.bf16.msra.mxu0 0
    %206 = vmatpush.bf16.msra.mxu0 0
    %207 = vmatpush.bf16.msra.mxu0 %v149
    %208 = vmatpush.bf16.msra.mxu0 %v145
    %209 = vmatmul.bf16.gmra.mxu0 %v160
    %v210 = vpop.f32.mrf.mxu0
    %v211 = vadd.f32 %v113, %v210
    %v212 = vpop.f32.mrf.mxu0
    %213 = vdwg.mxu0
    %v214 = vpack.c.bf16 %v172, %v172
    %v215 = vpack.c.bf16 %v185, %v185
    %v216 = vpack.c.bf16 %v198, %v198
    %v217 = vpack.c.bf16 %v211, %v211
    %v218 = vld [vmem:[#allocation7] sm:$0xff]
    %v219 = vld [vmem:[#allocation7 + $0x8] sm:$0xff]
    %v220 = vld [vmem:[#allocation7 + $0x10] sm:$0xff]
    %v221 = vld [vmem:[#allocation7 + $0x18] sm:$0xff]
    %v222 = vld [vmem:[#allocation7 + $0x20] sm:$0xff]
    %v223 = vld [vmem:[#allocation7 + $0x28] sm:$0xff]
    %v224 = vld [vmem:[#allocation7 + $0x30] sm:$0xff]
    %v225 = vld [vmem:[#allocation7 + $0x38] sm:$0xff]
    %v226 = vld [vmem:[#allocation7 + $0x40] sm:$0xff]
    %v227 = vld [vmem:[#allocation7 + $0x48] sm:$0xff]
    %v228 = vld [vmem:[#allocation7 + $0x50] sm:$0xff]
    %v229 = vld [vmem:[#allocation7 + $0x58] sm:$0xff]
    %v230 = vld [vmem:[#allocation7 + $0x60] sm:$0xff]
    %v231 = vld [vmem:[#allocation7 + $0x68] sm:$0xff]
    %v232 = vld [vmem:[#allocation7 + $0x70] sm:$0xff]
    %v233 = vld [vmem:[#allocation7 + $0x78] sm:$0xff]
    %v234 = vld [vmem:[#allocation7 + $0x80] sm:$0xff]
    %v235 = vld [vmem:[#allocation7 + $0x88] sm:$0xff]
    %v236 = vld [vmem:[#allocation7 + $0x90] sm:$0xff]
    %v237 = vld [vmem:[#allocation7 + $0x98] sm:$0xff]
    %v238 = vld [vmem:[#allocation7 + $0xa0] sm:$0xff]
    %v239 = vld [vmem:[#allocation7 + $0xa8] sm:$0xff]
    %v240 = vld [vmem:[#allocation7 + $0xb0] sm:$0xff]
    %v241 = vld [vmem:[#allocation7 + $0xb8] sm:$0xff]
    %v242 = vld [vmem:[#allocation7 + $0xc0] sm:$0xff]
    %v243 = vld [vmem:[#allocation7 + $0xc8] sm:$0xff]
    %v244 = vld [vmem:[#allocation7 + $0xd0] sm:$0xff]
    %v245 = vld [vmem:[#allocation7 + $0xd8] sm:$0xff]
    %v246 = vld [vmem:[#allocation7 + $0xe0] sm:$0xff]
    %v247 = vld [vmem:[#allocation7 + $0xe8] sm:$0xff]
    %v248 = vld [vmem:[#allocation7 + $0xf0] sm:$0xff]
    %v249 = vld [vmem:[#allocation7 + $0xf8] sm:$0xff]
    %v250 = vld [vmem:[#allocation7 + $0x100] sm:$0xff]
    %v251 = vld [vmem:[#allocation7 + $0x108] sm:$0xff]
    %v252 = vld [vmem:[#allocation7 + $0x110] sm:$0xff]
    %v253 = vld [vmem:[#allocation7 + $0x118] sm:$0xff]
    %v254 = vld [vmem:[#allocation7 + $0x120] sm:$0xff]
    %v255 = vld [vmem:[#allocation7 + $0x128] sm:$0xff]
    %v256 = vld [vmem:[#allocation7 + $0x130] sm:$0xff]
    %v257 = vld [vmem:[#allocation7 + $0x138] sm:$0xff]
    %v258 = vld [vmem:[#allocation7 + $0x140] sm:$0xff]
    %v259 = vld [vmem:[#allocation7 + $0x148] sm:$0xff]
    %v260 = vld [vmem:[#allocation7 + $0x150] sm:$0xff]
    %v261 = vld [vmem:[#allocation7 + $0x158] sm:$0xff]
    %v262 = vld [vmem:[#allocation7 + $0x160] sm:$0xff]
    %v263 = vld [vmem:[#allocation7 + $0x168] sm:$0xff]
    %v264 = vld [vmem:[#allocation7 + $0x170] sm:$0xff]
    %v265 = vld [vmem:[#allocation7 + $0x178] sm:$0xff]
    %v266 = vld [vmem:[#allocation7 + $0x180] sm:$0xff]
    %v267 = vld [vmem:[#allocation7 + $0x188] sm:$0xff]
    %v268 = vld [vmem:[#allocation7 + $0x190] sm:$0xff]
    %v269 = vld [vmem:[#allocation7 + $0x198] sm:$0xff]
    %v270 = vld [vmem:[#allocation7 + $0x1a0] sm:$0xff]
    %v271 = vld [vmem:[#allocation7 + $0x1a8] sm:$0xff]
    %v272 = vld [vmem:[#allocation7 + $0x1b0] sm:$0xff]
    %v273 = vld [vmem:[#allocation7 + $0x1b8] sm:$0xff]
    %v274 = vld [vmem:[#allocation7 + $0x1c0] sm:$0xff]
    %v275 = vld [vmem:[#allocation7 + $0x1c8] sm:$0xff]
    %v276 = vld [vmem:[#allocation7 + $0x1d0] sm:$0xff]
    %v277 = vld [vmem:[#allocation7 + $0x1d8] sm:$0xff]
    %v278 = vld [vmem:[#allocation7 + $0x1e0] sm:$0xff]
    %v279 = vld [vmem:[#allocation7 + $0x1e8] sm:$0xff]
    %v280 = vld [vmem:[#allocation7 + $0x1f0] sm:$0xff]
    %v281 = vld [vmem:[#allocation7 + $0x1f8] sm:$0xff]
    %v282 = vld [vmem:[#allocation7 + $0x200] sm:$0xff]
    %v283 = vld [vmem:[#allocation7 + $0x208] sm:$0xff]
    %v284 = vld [vmem:[#allocation7 + $0x210] sm:$0xff]
    %v285 = vld [vmem:[#allocation7 + $0x218] sm:$0xff]
    %v286 = vld [vmem:[#allocation7 + $0x220] sm:$0xff]
    %v287 = vld [vmem:[#allocation7 + $0x228] sm:$0xff]
    %v288 = vld [vmem:[#allocation7 + $0x230] sm:$0xff]
    %v289 = vld [vmem:[#allocation7 + $0x238] sm:$0xff]
    %v290 = vld [vmem:[#allocation7 + $0x240] sm:$0xff]
    %v291 = vld [vmem:[#allocation7 + $0x248] sm:$0xff]
    %v292 = vld [vmem:[#allocation7 + $0x250] sm:$0xff]
    %v293 = vld [vmem:[#allocation7 + $0x258] sm:$0xff]
    %v294 = vld [vmem:[#allocation7 + $0x260] sm:$0xff]
    %v295 = vld [vmem:[#allocation7 + $0x268] sm:$0xff]
    %v296 = vld [vmem:[#allocation7 + $0x270] sm:$0xff]
    %v297 = vld [vmem:[#allocation7 + $0x278] sm:$0xff]
    %v298 = vld [vmem:[#allocation7 + $0x280] sm:$0xff]
    %v299 = vld [vmem:[#allocation7 + $0x288] sm:$0xff]
    %v300 = vld [vmem:[#allocation7 + $0x290] sm:$0xff]
    %v301 = vld [vmem:[#allocation7 + $0x298] sm:$0xff]
    %v302 = vld [vmem:[#allocation7 + $0x2a0] sm:$0xff]
    %v303 = vld [vmem:[#allocation7 + $0x2a8] sm:$0xff]
    %v304 = vld [vmem:[#allocation7 + $0x2b0] sm:$0xff]
    %v305 = vld [vmem:[#allocation7 + $0x2b8] sm:$0xff]
    %v306 = vld [vmem:[#allocation7 + $0x2c0] sm:$0xff]
    %v307 = vld [vmem:[#allocation7 + $0x2c8] sm:$0xff]
    %v308 = vld [vmem:[#allocation7 + $0x2d0] sm:$0xff]
    %v309 = vld [vmem:[#allocation7 + $0x2d8] sm:$0xff]
    %v310 = vld [vmem:[#allocation7 + $0x2e0] sm:$0xff]
    %v311 = vld [vmem:[#allocation7 + $0x2e8] sm:$0xff]
    %v312 = vld [vmem:[#allocation7 + $0x2f0] sm:$0xff]
    %v313 = vld [vmem:[#allocation7 + $0x2f8] sm:$0xff]
    %v314 = vld [vmem:[#allocation7 + $0x300] sm:$0xff]
    %v315 = vld [vmem:[#allocation7 + $0x308] sm:$0xff]
    %v316 = vld [vmem:[#allocation7 + $0x310] sm:$0xff]
    %v317 = vld [vmem:[#allocation7 + $0x318] sm:$0xff]
    %v318 = vld [vmem:[#allocation7 + $0x320] sm:$0xff]
    %v319 = vld [vmem:[#allocation7 + $0x328] sm:$0xff]
    %v320 = vld [vmem:[#allocation7 + $0x330] sm:$0xff]
    %v321 = vld [vmem:[#allocation7 + $0x338] sm:$0xff]
    %v322 = vld [vmem:[#allocation7 + $0x340] sm:$0xff]
    %v323 = vld [vmem:[#allocation7 + $0x348] sm:$0xff]
    %v324 = vld [vmem:[#allocation7 + $0x350] sm:$0xff]
    %v325 = vld [vmem:[#allocation7 + $0x358] sm:$0xff]
    %v326 = vld [vmem:[#allocation7 + $0x360] sm:$0xff]
    %v327 = vld [vmem:[#allocation7 + $0x368] sm:$0xff]
    %v328 = vld [vmem:[#allocation7 + $0x370] sm:$0xff]
    %v329 = vld [vmem:[#allocation7 + $0x378] sm:$0xff]
    %v330 = vld [vmem:[#allocation7 + $0x380] sm:$0xff]
    %v331 = vld [vmem:[#allocation7 + $0x388] sm:$0xff]
    %v332 = vld [vmem:[#allocation7 + $0x390] sm:$0xff]
    %v333 = vld [vmem:[#allocation7 + $0x398] sm:$0xff]
    %v334 = vld [vmem:[#allocation7 + $0x3a0] sm:$0xff]
    %v335 = vld [vmem:[#allocation7 + $0x3a8] sm:$0xff]
    %v336 = vld [vmem:[#allocation7 + $0x3b0] sm:$0xff]
    %v337 = vld [vmem:[#allocation7 + $0x3b8] sm:$0xff]
    %v338 = vld [vmem:[#allocation7 + $0x3c0] sm:$0xff]
    %v339 = vld [vmem:[#allocation7 + $0x3c8] sm:$0xff]
    %v340 = vld [vmem:[#allocation7 + $0x3d0] sm:$0xff]
    %v341 = vld [vmem:[#allocation7 + $0x3d8] sm:$0xff]
    %v342 = vld [vmem:[#allocation7 + $0x3e0] sm:$0xff]
    %v343 = vld [vmem:[#allocation7 + $0x3e8] sm:$0xff]
    %v344 = vld [vmem:[#allocation7 + $0x3f0] sm:$0xff]
    %v345 = vld [vmem:[#allocation7 + $0x3f8] sm:$0xff]
    %v347 = vperm.slane %v99, 0
    %v348 = vperm.slane %v99, 1
    %v349 = vperm.slane %v99, 2
    %v350 = vperm.slane %v99, 3
    %v483 = vunpack.c.l.b16 %v218
    %v484 = vunpack.c.h.b16 %v218
    %v485 = vunpack.c.l.b16 %v219
    %v486 = vunpack.c.h.b16 %v219
    %v487 = vunpack.c.l.b16 %v220
    %v488 = vunpack.c.h.b16 %v220
    %v489 = vunpack.c.l.b16 %v221
    %v490 = vunpack.c.h.b16 %v221
    %v491 = vunpack.c.l.b16 %v222
    %v492 = vunpack.c.h.b16 %v222
    %v493 = vunpack.c.l.b16 %v223
    %v494 = vunpack.c.h.b16 %v223
    %v495 = vunpack.c.l.b16 %v224
    %v496 = vunpack.c.h.b16 %v224
    %v497 = vunpack.c.l.b16 %v225
    %v498 = vunpack.c.h.b16 %v225
    %v499 = vunpack.c.l.b16 %v226
    %v500 = vunpack.c.h.b16 %v226
    %v501 = vunpack.c.l.b16 %v227
    %v502 = vunpack.c.h.b16 %v227
    %v503 = vunpack.c.l.b16 %v228
    %v504 = vunpack.c.h.b16 %v228
    %v505 = vunpack.c.l.b16 %v229
    %v506 = vunpack.c.h.b16 %v229
    %v507 = vunpack.c.l.b16 %v230
    %v508 = vunpack.c.h.b16 %v230
    %v509 = vunpack.c.l.b16 %v231
    %v510 = vunpack.c.h.b16 %v231
    %v511 = vunpack.c.l.b16 %v232
    %v512 = vunpack.c.h.b16 %v232
    %v513 = vunpack.c.l.b16 %v233
    %v514 = vunpack.c.h.b16 %v233
    %v515 = vunpack.c.l.b16 %v234
    %v516 = vunpack.c.h.b16 %v234
    %v517 = vunpack.c.l.b16 %v235
    %v518 = vunpack.c.h.b16 %v235
    %v519 = vunpack.c.l.b16 %v236
    %v520 = vunpack.c.h.b16 %v236
    %v521 = vunpack.c.l.b16 %v237
    %v522 = vunpack.c.h.b16 %v237
    %v523 = vunpack.c.l.b16 %v238
    %v524 = vunpack.c.h.b16 %v238
    %v525 = vunpack.c.l.b16 %v239
    %v526 = vunpack.c.h.b16 %v239
    %v527 = vunpack.c.l.b16 %v240
    %v528 = vunpack.c.h.b16 %v240
    %v529 = vunpack.c.l.b16 %v241
    %v530 = vunpack.c.h.b16 %v241
    %v531 = vunpack.c.l.b16 %v242
    %v532 = vunpack.c.h.b16 %v242
    %v533 = vunpack.c.l.b16 %v243
    %v534 = vunpack.c.h.b16 %v243
    %v535 = vunpack.c.l.b16 %v244
    %v536 = vunpack.c.h.b16 %v244
    %v537 = vunpack.c.l.b16 %v245
    %v538 = vunpack.c.h.b16 %v245
    %v539 = vunpack.c.l.b16 %v246
    %v540 = vunpack.c.h.b16 %v246
    %v541 = vunpack.c.l.b16 %v247
    %v542 = vunpack.c.h.b16 %v247
    %v543 = vunpack.c.l.b16 %v248
    %v544 = vunpack.c.h.b16 %v248
    %v545 = vunpack.c.l.b16 %v249
    %v546 = vunpack.c.h.b16 %v249
    %v547 = vunpack.c.l.b16 %v250
    %v548 = vunpack.c.h.b16 %v250
    %v549 = vunpack.c.l.b16 %v251
    %v550 = vunpack.c.h.b16 %v251
    %v551 = vunpack.c.l.b16 %v252
    %v552 = vunpack.c.h.b16 %v252
    %v553 = vunpack.c.l.b16 %v253
    %v554 = vunpack.c.h.b16 %v253
    %v555 = vunpack.c.l.b16 %v254
    %v556 = vunpack.c.h.b16 %v254
    %v557 = vunpack.c.l.b16 %v255
    %v558 = vunpack.c.h.b16 %v255
    %v559 = vunpack.c.l.b16 %v256
    %v560 = vunpack.c.h.b16 %v256
    %v561 = vunpack.c.l.b16 %v257
    %v562 = vunpack.c.h.b16 %v257
    %v563 = vunpack.c.l.b16 %v258
    %v564 = vunpack.c.h.b16 %v258
    %v565 = vunpack.c.l.b16 %v259
    %v566 = vunpack.c.h.b16 %v259
    %v567 = vunpack.c.l.b16 %v260
    %v568 = vunpack.c.h.b16 %v260
    %v569 = vunpack.c.l.b16 %v261
    %v570 = vunpack.c.h.b16 %v261
    %v571 = vunpack.c.l.b16 %v262
    %v572 = vunpack.c.h.b16 %v262
    %v573 = vunpack.c.l.b16 %v263
    %v574 = vunpack.c.h.b16 %v263
    %v575 = vunpack.c.l.b16 %v264
    %v576 = vunpack.c.h.b16 %v264
    %v577 = vunpack.c.l.b16 %v265
    %v578 = vunpack.c.h.b16 %v265
    %v579 = vunpack.c.l.b16 %v266
    %v580 = vunpack.c.h.b16 %v266
    %v581 = vunpack.c.l.b16 %v267
    %v582 = vunpack.c.h.b16 %v267
    %v583 = vunpack.c.l.b16 %v268
    %v584 = vunpack.c.h.b16 %v268
    %v585 = vunpack.c.l.b16 %v269
    %v586 = vunpack.c.h.b16 %v269
    %v587 = vunpack.c.l.b16 %v270
    %v588 = vunpack.c.h.b16 %v270
    %v589 = vunpack.c.l.b16 %v271
    %v590 = vunpack.c.h.b16 %v271
    %v591 = vunpack.c.l.b16 %v272
    %v592 = vunpack.c.h.b16 %v272
    %v593 = vunpack.c.l.b16 %v273
    %v594 = vunpack.c.h.b16 %v273
    %v595 = vunpack.c.l.b16 %v274
    %v596 = vunpack.c.h.b16 %v274
    %v597 = vunpack.c.l.b16 %v275
    %v598 = vunpack.c.h.b16 %v275
    %v599 = vunpack.c.l.b16 %v276
    %v600 = vunpack.c.h.b16 %v276
    %v601 = vunpack.c.l.b16 %v277
    %v602 = vunpack.c.h.b16 %v277
    %v603 = vunpack.c.l.b16 %v278
    %v604 = vunpack.c.h.b16 %v278
    %v605 = vunpack.c.l.b16 %v279
    %v606 = vunpack.c.h.b16 %v279
    %v607 = vunpack.c.l.b16 %v280
    %v608 = vunpack.c.h.b16 %v280
    %v609 = vunpack.c.l.b16 %v281
    %v610 = vunpack.c.h.b16 %v281
    %v611 = vunpack.c.l.b16 %v282
    %v612 = vunpack.c.h.b16 %v282
    %v613 = vunpack.c.l.b16 %v283
    %v614 = vunpack.c.h.b16 %v283
    %v615 = vunpack.c.l.b16 %v284
    %v616 = vunpack.c.h.b16 %v284
    %v617 = vunpack.c.l.b16 %v285
    %v618 = vunpack.c.h.b16 %v285
    %v619 = vunpack.c.l.b16 %v286
    %v620 = vunpack.c.h.b16 %v286
    %v621 = vunpack.c.l.b16 %v287
    %v622 = vunpack.c.h.b16 %v287
    %v623 = vunpack.c.l.b16 %v288
    %v624 = vunpack.c.h.b16 %v288
    %v625 = vunpack.c.l.b16 %v289
    %v626 = vunpack.c.h.b16 %v289
    %v627 = vunpack.c.l.b16 %v290
    %v628 = vunpack.c.h.b16 %v290
    %v629 = vunpack.c.l.b16 %v291
    %v630 = vunpack.c.h.b16 %v291
    %v631 = vunpack.c.l.b16 %v292
    %v632 = vunpack.c.h.b16 %v292
    %v633 = vunpack.c.l.b16 %v293
    %v634 = vunpack.c.h.b16 %v293
    %v635 = vunpack.c.l.b16 %v294
    %v636 = vunpack.c.h.b16 %v294
    %v637 = vunpack.c.l.b16 %v295
    %v638 = vunpack.c.h.b16 %v295
    %v639 = vunpack.c.l.b16 %v296
    %v640 = vunpack.c.h.b16 %v296
    %v641 = vunpack.c.l.b16 %v297
    %v642 = vunpack.c.h.b16 %v297
    %v643 = vunpack.c.l.b16 %v298
    %v644 = vunpack.c.h.b16 %v298
    %v645 = vunpack.c.l.b16 %v299
    %v646 = vunpack.c.h.b16 %v299
    %v647 = vunpack.c.l.b16 %v300
    %v648 = vunpack.c.h.b16 %v300
    %v649 = vunpack.c.l.b16 %v301
    %v650 = vunpack.c.h.b16 %v301
    %v651 = vunpack.c.l.b16 %v302
    %v652 = vunpack.c.h.b16 %v302
    %v653 = vunpack.c.l.b16 %v303
    %v654 = vunpack.c.h.b16 %v303
    %v655 = vunpack.c.l.b16 %v304
    %v656 = vunpack.c.h.b16 %v304
    %v657 = vunpack.c.l.b16 %v305
    %v658 = vunpack.c.h.b16 %v305
    %v659 = vunpack.c.l.b16 %v306
    %v660 = vunpack.c.h.b16 %v306
    %v661 = vunpack.c.l.b16 %v307
    %v662 = vunpack.c.h.b16 %v307
    %v663 = vunpack.c.l.b16 %v308
    %v664 = vunpack.c.h.b16 %v308
    %v665 = vunpack.c.l.b16 %v309
    %v666 = vunpack.c.h.b16 %v309
    %v667 = vunpack.c.l.b16 %v310
    %v668 = vunpack.c.h.b16 %v310
    %v669 = vunpack.c.l.b16 %v311
    %v670 = vunpack.c.h.b16 %v311
    %v671 = vunpack.c.l.b16 %v312
    %v672 = vunpack.c.h.b16 %v312
    %v673 = vunpack.c.l.b16 %v313
    %v674 = vunpack.c.h.b16 %v313
    %v675 = vunpack.c.l.b16 %v314
    %v676 = vunpack.c.h.b16 %v314
    %v677 = vunpack.c.l.b16 %v315
    %v678 = vunpack.c.h.b16 %v315
    %v679 = vunpack.c.l.b16 %v316
    %v680 = vunpack.c.h.b16 %v316
    %v681 = vunpack.c.l.b16 %v317
    %v682 = vunpack.c.h.b16 %v317
    %v683 = vunpack.c.l.b16 %v318
    %v684 = vunpack.c.h.b16 %v318
    %v685 = vunpack.c.l.b16 %v319
    %v686 = vunpack.c.h.b16 %v319
    %v687 = vunpack.c.l.b16 %v320
    %v688 = vunpack.c.h.b16 %v320
    %v689 = vunpack.c.l.b16 %v321
    %v690 = vunpack.c.h.b16 %v321
    %v691 = vunpack.c.l.b16 %v322
    %v692 = vunpack.c.h.b16 %v322
    %v693 = vunpack.c.l.b16 %v323
    %v694 = vunpack.c.h.b16 %v323
    %v695 = vunpack.c.l.b16 %v324
    %v696 = vunpack.c.h.b16 %v324
    %v697 = vunpack.c.l.b16 %v325
    %v698 = vunpack.c.h.b16 %v325
    %v699 = vunpack.c.l.b16 %v326
    %v700 = vunpack.c.h.b16 %v326
    %v701 = vunpack.c.l.b16 %v327
    %v702 = vunpack.c.h.b16 %v327
    %v703 = vunpack.c.l.b16 %v328
    %v704 = vunpack.c.h.b16 %v328
    %v705 = vunpack.c.l.b16 %v329
    %v706 = vunpack.c.h.b16 %v329
    %v707 = vunpack.c.l.b16 %v330
    %v708 = vunpack.c.h.b16 %v330
    %v709 = vunpack.c.l.b16 %v331
    %v710 = vunpack.c.h.b16 %v331
    %v711 = vunpack.c.l.b16 %v332
    %v712 = vunpack.c.h.b16 %v332
    %v713 = vunpack.c.l.b16 %v333
    %v714 = vunpack.c.h.b16 %v333
    %v715 = vunpack.c.l.b16 %v334
    %v716 = vunpack.c.h.b16 %v334
    %v717 = vunpack.c.l.b16 %v335
    %v718 = vunpack.c.h.b16 %v335
    %v719 = vunpack.c.l.b16 %v336
    %v720 = vunpack.c.h.b16 %v336
    %v721 = vunpack.c.l.b16 %v337
    %v722 = vunpack.c.h.b16 %v337
    %v723 = vunpack.c.l.b16 %v338
    %v724 = vunpack.c.h.b16 %v338
    %v725 = vunpack.c.l.b16 %v339
    %v726 = vunpack.c.h.b16 %v339
    %v727 = vunpack.c.l.b16 %v340
    %v728 = vunpack.c.h.b16 %v340
    %v729 = vunpack.c.l.b16 %v341
    %v730 = vunpack.c.h.b16 %v341
    %v731 = vunpack.c.l.b16 %v342
    %v732 = vunpack.c.h.b16 %v342
    %v733 = vunpack.c.l.b16 %v343
    %v734 = vunpack.c.h.b16 %v343
    %v735 = vunpack.c.l.b16 %v344
    %v736 = vunpack.c.h.b16 %v344
    %v737 = vunpack.c.l.b16 %v345
    %v738 = vunpack.c.h.b16 %v345
    %v739 = vpack.c.b16 %v487, %v483
    %v740 = vpack.c.b16 %v488, %v484
    %v741 = vpack.c.b16 %v489, %v485
    %v742 = vpack.c.b16 %v490, %v486
    %v743 = vpack.c.b16 %v495, %v491
    %v744 = vpack.c.b16 %v496, %v492
    %v745 = vpack.c.b16 %v497, %v493
    %v746 = vpack.c.b16 %v498, %v494
    %v747 = vpack.c.b16 %v503, %v499
    %v748 = vpack.c.b16 %v504, %v500
    %v749 = vpack.c.b16 %v505, %v501
    %v750 = vpack.c.b16 %v506, %v502
    %v751 = vpack.c.b16 %v511, %v507
    %v752 = vpack.c.b16 %v512, %v508
    %v753 = vpack.c.b16 %v513, %v509
    %v754 = vpack.c.b16 %v514, %v510
    %v755 = vpack.c.b16 %v519, %v515
    %v756 = vpack.c.b16 %v520, %v516
    %v757 = vpack.c.b16 %v521, %v517
    %v758 = vpack.c.b16 %v522, %v518
    %v759 = vpack.c.b16 %v527, %v523
    %v760 = vpack.c.b16 %v528, %v524
    %v761 = vpack.c.b16 %v529, %v525
    %v762 = vpack.c.b16 %v530, %v526
    %v763 = vpack.c.b16 %v535, %v531
    %v764 = vpack.c.b16 %v536, %v532
    %v765 = vpack.c.b16 %v537, %v533
    %v766 = vpack.c.b16 %v538, %v534
    %v767 = vpack.c.b16 %v543, %v539
    %v768 = vpack.c.b16 %v544, %v540
    %v769 = vpack.c.b16 %v545, %v541
    %v770 = vpack.c.b16 %v546, %v542
    %v771 = vpack.c.b16 %v551, %v547
    %v772 = vpack.c.b16 %v552, %v548
    %v773 = vpack.c.b16 %v553, %v549
    %v774 = vpack.c.b16 %v554, %v550
    %v775 = vpack.c.b16 %v559, %v555
    %v776 = vpack.c.b16 %v560, %v556
    %v777 = vpack.c.b16 %v561, %v557
    %v778 = vpack.c.b16 %v562, %v558
    %v779 = vpack.c.b16 %v567, %v563
    %v780 = vpack.c.b16 %v568, %v564
    %v781 = vpack.c.b16 %v569, %v565
    %v782 = vpack.c.b16 %v570, %v566
    %v783 = vpack.c.b16 %v575, %v571
    %v784 = vpack.c.b16 %v576, %v572
    %v785 = vpack.c.b16 %v577, %v573
    %v786 = vpack.c.b16 %v578, %v574
    %v787 = vpack.c.b16 %v583, %v579
    %v788 = vpack.c.b16 %v584, %v580
    %v789 = vpack.c.b16 %v585, %v581
    %v790 = vpack.c.b16 %v586, %v582
    %v791 = vpack.c.b16 %v591, %v587
    %v792 = vpack.c.b16 %v592, %v588
    %v793 = vpack.c.b16 %v593, %v589
    %v794 = vpack.c.b16 %v594, %v590
    %v795 = vpack.c.b16 %v599, %v595
    %v796 = vpack.c.b16 %v600, %v596
    %v797 = vpack.c.b16 %v601, %v597
    %v798 = vpack.c.b16 %v602, %v598
    %v799 = vpack.c.b16 %v607, %v603
    %v800 = vpack.c.b16 %v608, %v604
    %v801 = vpack.c.b16 %v609, %v605
    %v802 = vpack.c.b16 %v610, %v606
    %v803 = vpack.c.b16 %v615, %v611
    %v804 = vpack.c.b16 %v616, %v612
    %v805 = vpack.c.b16 %v617, %v613
    %v806 = vpack.c.b16 %v618, %v614
    %v807 = vpack.c.b16 %v623, %v619
    %v808 = vpack.c.b16 %v624, %v620
    %v809 = vpack.c.b16 %v625, %v621
    %v810 = vpack.c.b16 %v626, %v622
    %v811 = vpack.c.b16 %v631, %v627
    %v812 = vpack.c.b16 %v632, %v628
    %v813 = vpack.c.b16 %v633, %v629
    %v814 = vpack.c.b16 %v634, %v630
    %v815 = vpack.c.b16 %v639, %v635
    %v816 = vpack.c.b16 %v640, %v636
    %v817 = vpack.c.b16 %v641, %v637
    %v818 = vpack.c.b16 %v642, %v638
    %v819 = vpack.c.b16 %v647, %v643
    %v820 = vpack.c.b16 %v648, %v644
    %v821 = vpack.c.b16 %v649, %v645
    %v822 = vpack.c.b16 %v650, %v646
    %v823 = vpack.c.b16 %v655, %v651
    %v824 = vpack.c.b16 %v656, %v652
    %v825 = vpack.c.b16 %v657, %v653
    %v826 = vpack.c.b16 %v658, %v654
    %v827 = vpack.c.b16 %v663, %v659
    %v828 = vpack.c.b16 %v664, %v660
    %v829 = vpack.c.b16 %v665, %v661
    %v830 = vpack.c.b16 %v666, %v662
    %v831 = vpack.c.b16 %v671, %v667
    %v832 = vpack.c.b16 %v672, %v668
    %v833 = vpack.c.b16 %v673, %v669
    %v834 = vpack.c.b16 %v674, %v670
    %v835 = vpack.c.b16 %v679, %v675
    %v836 = vpack.c.b16 %v680, %v676
    %v837 = vpack.c.b16 %v681, %v677
    %v838 = vpack.c.b16 %v682, %v678
    %v839 = vpack.c.b16 %v687, %v683
    %v840 = vpack.c.b16 %v688, %v684
    %v841 = vpack.c.b16 %v689, %v685
    %v842 = vpack.c.b16 %v690, %v686
    %v843 = vpack.c.b16 %v695, %v691
    %v844 = vpack.c.b16 %v696, %v692
    %v845 = vpack.c.b16 %v697, %v693
    %v846 = vpack.c.b16 %v698, %v694
    %v847 = vpack.c.b16 %v703, %v699
    %v848 = vpack.c.b16 %v704, %v700
    %v849 = vpack.c.b16 %v705, %v701
    %v850 = vpack.c.b16 %v706, %v702
    %v851 = vpack.c.b16 %v711, %v707
    %v852 = vpack.c.b16 %v712, %v708
    %v853 = vpack.c.b16 %v713, %v709
    %v854 = vpack.c.b16 %v714, %v710
    %v855 = vpack.c.b16 %v719, %v715
    %v856 = vpack.c.b16 %v720, %v716
    %v857 = vpack.c.b16 %v721, %v717
    %v858 = vpack.c.b16 %v722, %v718
    %v859 = vpack.c.b16 %v727, %v723
    %v860 = vpack.c.b16 %v728, %v724
    %v861 = vpack.c.b16 %v729, %v725
    %v862 = vpack.c.b16 %v730, %v726
    %v863 = vpack.c.b16 %v735, %v731
    %v864 = vpack.c.b16 %v736, %v732
    %v865 = vpack.c.b16 %v737, %v733
    %v866 = vpack.c.b16 %v738, %v734
    %995 = vmatpush.bf16.msra.mxu0 %v767
    %996 = vmatpush.bf16.msra.mxu0 %v763
    %997 = vmatpush.bf16.msra.mxu0 %v759
    %998 = vmatpush.bf16.msra.mxu0 %v755
    %999 = vmatpush.bf16.msra.mxu0 %v751
    %1000 = vmatpush.bf16.msra.mxu0 %v747
    %1001 = vmatpush.bf16.msra.mxu0 %v743
    %1002 = vmatpush.bf16.msra.mxu0 %v739
    %1003 = vmatmul.bf16.gmra.mxu0 %v214
    %v1004 = vpop.f32.mrf.mxu0
    %v1005 = vadd.f32 %v347, %v1004
    %v1006 = vpop.f32.mrf.mxu0
    %1007 = vdwg.mxu0
    %1008 = vmatpush.bf16.msra.mxu0 %v799
    %1009 = vmatpush.bf16.msra.mxu0 %v795
    %1010 = vmatpush.bf16.msra.mxu0 %v791
    %1011 = vmatpush.bf16.msra.mxu0 %v787
    %1012 = vmatpush.bf16.msra.mxu0 %v783
    %1013 = vmatpush.bf16.msra.mxu0 %v779
    %1014 = vmatpush.bf16.msra.mxu0 %v775
    %1015 = vmatpush.bf16.msra.mxu0 %v771
    %1016 = vmatmul.bf16.gmra.mxu0 %v215
    %v1017 = vpop.f32.mrf.mxu0
    %v1018 = vadd.f32 %v1005, %v1017
    %v1019 = vpop.f32.mrf.mxu0
    %1020 = vdwg.mxu0
    %1021 = vmatpush.bf16.msra.mxu0 %v831
    %1022 = vmatpush.bf16.msra.mxu0 %v827
    %1023 = vmatpush.bf16.msra.mxu0 %v823
    %1024 = vmatpush.bf16.msra.mxu0 %v819
    %1025 = vmatpush.bf16.msra.mxu0 %v815
    %1026 = vmatpush.bf16.msra.mxu0 %v811
    %1027 = vmatpush.bf16.msra.mxu0 %v807
    %1028 = vmatpush.bf16.msra.mxu0 %v803
    %1029 = vmatmul.bf16.gmra.mxu0 %v216
    %v1030 = vpop.f32.mrf.mxu0
    %v1031 = vadd.f32 %v1018, %v1030
    %v1032 = vpop.f32.mrf.mxu0
    %1033 = vdwg.mxu0
    %1034 = vmatpush.bf16.msra.mxu0 %v863
    %1035 = vmatpush.bf16.msra.mxu0 %v859
    %1036 = vmatpush.bf16.msra.mxu0 %v855
    %1037 = vmatpush.bf16.msra.mxu0 %v851
    %1038 = vmatpush.bf16.msra.mxu0 %v847
    %1039 = vmatpush.bf16.msra.mxu0 %v843
    %1040 = vmatpush.bf16.msra.mxu0 %v839
    %1041 = vmatpush.bf16.msra.mxu0 %v835
    %1042 = vmatmul.bf16.gmra.mxu0 %v217
    %v1043 = vpop.f32.mrf.mxu0
    %v1044 = vadd.f32 %v1031, %v1043
    %v1045 = vpop.f32.mrf.mxu0
    %1046 = vdwg.mxu0
    %1047 = vmatpush.bf16.msra.mxu0 %v768
    %1048 = vmatpush.bf16.msra.mxu0 %v764
    %1049 = vmatpush.bf16.msra.mxu0 %v760
    %1050 = vmatpush.bf16.msra.mxu0 %v756
    %1051 = vmatpush.bf16.msra.mxu0 %v752
    %1052 = vmatpush.bf16.msra.mxu0 %v748
    %1053 = vmatpush.bf16.msra.mxu0 %v744
    %1054 = vmatpush.bf16.msra.mxu0 %v740
    %1055 = vmatmul.bf16.gmra.mxu0 %v214
    %v1056 = vpop.f32.mrf.mxu0
    %v1057 = vadd.f32 %v348, %v1056
    %v1058 = vpop.f32.mrf.mxu0
    %1059 = vdwg.mxu0
    %1060 = vmatpush.bf16.msra.mxu0 %v800
    %1061 = vmatpush.bf16.msra.mxu0 %v796
    %1062 = vmatpush.bf16.msra.mxu0 %v792
    %1063 = vmatpush.bf16.msra.mxu0 %v788
    %1064 = vmatpush.bf16.msra.mxu0 %v784
    %1065 = vmatpush.bf16.msra.mxu0 %v780
    %1066 = vmatpush.bf16.msra.mxu0 %v776
    %1067 = vmatpush.bf16.msra.mxu0 %v772
    %1068 = vmatmul.bf16.gmra.mxu0 %v215
    %v1069 = vpop.f32.mrf.mxu0
    %v1070 = vadd.f32 %v1057, %v1069
    %v1071 = vpop.f32.mrf.mxu0
    %1072 = vdwg.mxu0
    %1073 = vmatpush.bf16.msra.mxu0 %v832
    %1074 = vmatpush.bf16.msra.mxu0 %v828
    %1075 = vmatpush.bf16.msra.mxu0 %v824
    %1076 = vmatpush.bf16.msra.mxu0 %v820
    %1077 = vmatpush.bf16.msra.mxu0 %v816
    %1078 = vmatpush.bf16.msra.mxu0 %v812
    %1079 = vmatpush.bf16.msra.mxu0 %v808
    %1080 = vmatpush.bf16.msra.mxu0 %v804
    %1081 = vmatmul.bf16.gmra.mxu0 %v216
    %v1082 = vpop.f32.mrf.mxu0
    %v1083 = vadd.f32 %v1070, %v1082
    %v1084 = vpop.f32.mrf.mxu0
    %1085 = vdwg.mxu0
    %1086 = vmatpush.bf16.msra.mxu0 %v864
    %1087 = vmatpush.bf16.msra.mxu0 %v860
    %1088 = vmatpush.bf16.msra.mxu0 %v856
    %1089 = vmatpush.bf16.msra.mxu0 %v852
    %1090 = vmatpush.bf16.msra.mxu0 %v848
    %1091 = vmatpush.bf16.msra.mxu0 %v844
    %1092 = vmatpush.bf16.msra.mxu0 %v840
    %1093 = vmatpush.bf16.msra.mxu0 %v836
    %1094 = vmatmul.bf16.gmra.mxu0 %v217
    %v1095 = vpop.f32.mrf.mxu0
    %v1096 = vadd.f32 %v1083, %v1095
    %v1097 = vpop.f32.mrf.mxu0
    %1098 = vdwg.mxu0
    %1099 = vmatpush.bf16.msra.mxu0 %v769
    %1100 = vmatpush.bf16.msra.mxu0 %v765
    %1101 = vmatpush.bf16.msra.mxu0 %v761
    %1102 = vmatpush.bf16.msra.mxu0 %v757
    %1103 = vmatpush.bf16.msra.mxu0 %v753
    %1104 = vmatpush.bf16.msra.mxu0 %v749
    %1105 = vmatpush.bf16.msra.mxu0 %v745
    %1106 = vmatpush.bf16.msra.mxu0 %v741
    %1107 = vmatmul.bf16.gmra.mxu0 %v214
    %v1108 = vpop.f32.mrf.mxu0
    %v1109 = vadd.f32 %v349, %v1108
    %v1110 = vpop.f32.mrf.mxu0
    %1111 = vdwg.mxu0
    %1112 = vmatpush.bf16.msra.mxu0 %v801
    %1113 = vmatpush.bf16.msra.mxu0 %v797
    %1114 = vmatpush.bf16.msra.mxu0 %v793
    %1115 = vmatpush.bf16.msra.mxu0 %v789
    %1116 = vmatpush.bf16.msra.mxu0 %v785
    %1117 = vmatpush.bf16.msra.mxu0 %v781
    %1118 = vmatpush.bf16.msra.mxu0 %v777
    %1119 = vmatpush.bf16.msra.mxu0 %v773
    %1120 = vmatmul.bf16.gmra.mxu0 %v215
    %v1121 = vpop.f32.mrf.mxu0
    %v1122 = vadd.f32 %v1109, %v1121
    %v1123 = vpop.f32.mrf.mxu0
    %1124 = vdwg.mxu0
    %1125 = vmatpush.bf16.msra.mxu0 %v833
    %1126 = vmatpush.bf16.msra.mxu0 %v829
    %1127 = vmatpush.bf16.msra.mxu0 %v825
    %1128 = vmatpush.bf16.msra.mxu0 %v821
    %1129 = vmatpush.bf16.msra.mxu0 %v817
    %1130 = vmatpush.bf16.msra.mxu0 %v813
    %1131 = vmatpush.bf16.msra.mxu0 %v809
    %1132 = vmatpush.bf16.msra.mxu0 %v805
    %1133 = vmatmul.bf16.gmra.mxu0 %v216
    %v1134 = vpop.f32.mrf.mxu0
    %v1135 = vadd.f32 %v1122, %v1134
    %v1136 = vpop.f32.mrf.mxu0
    %1137 = vdwg.mxu0
    %1138 = vmatpush.bf16.msra.mxu0 %v865
    %1139 = vmatpush.bf16.msra.mxu0 %v861
    %1140 = vmatpush.bf16.msra.mxu0 %v857
    %1141 = vmatpush.bf16.msra.mxu0 %v853
    %1142 = vmatpush.bf16.msra.mxu0 %v849
    %1143 = vmatpush.bf16.msra.mxu0 %v845
    %1144 = vmatpush.bf16.msra.mxu0 %v841
    %1145 = vmatpush.bf16.msra.mxu0 %v837
    %1146 = vmatmul.bf16.gmra.mxu0 %v217
    %v1147 = vpop.f32.mrf.mxu0
    %v1148 = vadd.f32 %v1135, %v1147
    %v1149 = vpop.f32.mrf.mxu0
    %1150 = vdwg.mxu0
    %1151 = vmatpush.bf16.msra.mxu0 %v770
    %1152 = vmatpush.bf16.msra.mxu0 %v766
    %1153 = vmatpush.bf16.msra.mxu0 %v762
    %1154 = vmatpush.bf16.msra.mxu0 %v758
    %1155 = vmatpush.bf16.msra.mxu0 %v754
    %1156 = vmatpush.bf16.msra.mxu0 %v750
    %1157 = vmatpush.bf16.msra.mxu0 %v746
    %1158 = vmatpush.bf16.msra.mxu0 %v742
    %1159 = vmatmul.bf16.gmra.mxu0 %v214
    %v1160 = vpop.f32.mrf.mxu0
    %v1161 = vadd.f32 %v350, %v1160
    %v1162 = vpop.f32.mrf.mxu0
    %1163 = vdwg.mxu0
    %1164 = vmatpush.bf16.msra.mxu0 %v802
    %1165 = vmatpush.bf16.msra.mxu0 %v798
    %1166 = vmatpush.bf16.msra.mxu0 %v794
    %1167 = vmatpush.bf16.msra.mxu0 %v790
    %1168 = vmatpush.bf16.msra.mxu0 %v786
    %1169 = vmatpush.bf16.msra.mxu0 %v782
    %1170 = vmatpush.bf16.msra.mxu0 %v778
    %1171 = vmatpush.bf16.msra.mxu0 %v774
    %1172 = vmatmul.bf16.gmra.mxu0 %v215
    %v1173 = vpop.f32.mrf.mxu0
    %v1174 = vadd.f32 %v1161, %v1173
    %v1175 = vpop.f32.mrf.mxu0
    %1176 = vdwg.mxu0
    %1177 = vmatpush.bf16.msra.mxu0 %v834
    %1178 = vmatpush.bf16.msra.mxu0 %v830
    %1179 = vmatpush.bf16.msra.mxu0 %v826
    %1180 = vmatpush.bf16.msra.mxu0 %v822
    %1181 = vmatpush.bf16.msra.mxu0 %v818
    %1182 = vmatpush.bf16.msra.mxu0 %v814
    %1183 = vmatpush.bf16.msra.mxu0 %v810
    %1184 = vmatpush.bf16.msra.mxu0 %v806
    %1185 = vmatmul.bf16.gmra.mxu0 %v216
    %v1186 = vpop.f32.mrf.mxu0
    %v1187 = vadd.f32 %v1174, %v1186
    %v1188 = vpop.f32.mrf.mxu0
    %1189 = vdwg.mxu0
    %1190 = vmatpush.bf16.msra.mxu0 %v866
    %1191 = vmatpush.bf16.msra.mxu0 %v862
    %1192 = vmatpush.bf16.msra.mxu0 %v858
    %1193 = vmatpush.bf16.msra.mxu0 %v854
    %1194 = vmatpush.bf16.msra.mxu0 %v850
    %1195 = vmatpush.bf16.msra.mxu0 %v846
    %1196 = vmatpush.bf16.msra.mxu0 %v842
    %1197 = vmatpush.bf16.msra.mxu0 %v838
    %1198 = vmatmul.bf16.gmra.mxu0 %v217
    %v1199 = vpop.f32.mrf.mxu0
    %v1200 = vadd.f32 %v1187, %v1199
    %v1201 = vpop.f32.mrf.mxu0
    %1202 = vdwg.mxu0
    %v1203 = vpack.c.bf16 %v1044, %v1044
    %v1204 = vpack.c.bf16 %v1096, %v1096
    %v1205 = vpack.c.bf16 %v1148, %v1148
    %v1206 = vpack.c.bf16 %v1200, %v1200
    %v1207 = vld [vmem:[#allocation8] sm:$0xf]
    %v1208 = vld [vmem:[#allocation8 + $0x4] sm:$0xf]
    %v1209 = vld [vmem:[#allocation8 + $0x8] sm:$0xf]
    %v1210 = vld [vmem:[#allocation8 + $0xc] sm:$0xf]
    %v1211 = vld [vmem:[#allocation8 + $0x10] sm:$0xf]
    %v1212 = vld [vmem:[#allocation8 + $0x14] sm:$0xf]
    %v1213 = vld [vmem:[#allocation8 + $0x18] sm:$0xf]
    %v1214 = vld [vmem:[#allocation8 + $0x1c] sm:$0xf]
    %v1215 = vld [vmem:[#allocation8 + $0x20] sm:$0xf]
    %v1216 = vld [vmem:[#allocation8 + $0x24] sm:$0xf]
    %v1217 = vld [vmem:[#allocation8 + $0x28] sm:$0xf]
    %v1218 = vld [vmem:[#allocation8 + $0x2c] sm:$0xf]
    %v1219 = vld [vmem:[#allocation8 + $0x30] sm:$0xf]
    %v1220 = vld [vmem:[#allocation8 + $0x34] sm:$0xf]
    %v1221 = vld [vmem:[#allocation8 + $0x38] sm:$0xf]
    %v1222 = vld [vmem:[#allocation8 + $0x3c] sm:$0xf]
    %v1223 = vld [vmem:[#allocation8 + $0x40] sm:$0xf]
    %v1224 = vld [vmem:[#allocation8 + $0x44] sm:$0xf]
    %v1225 = vld [vmem:[#allocation8 + $0x48] sm:$0xf]
    %v1226 = vld [vmem:[#allocation8 + $0x4c] sm:$0xf]
    %v1227 = vld [vmem:[#allocation8 + $0x50] sm:$0xf]
    %v1228 = vld [vmem:[#allocation8 + $0x54] sm:$0xf]
    %v1229 = vld [vmem:[#allocation8 + $0x58] sm:$0xf]
    %v1230 = vld [vmem:[#allocation8 + $0x5c] sm:$0xf]
    %v1231 = vld [vmem:[#allocation8 + $0x60] sm:$0xf]
    %v1232 = vld [vmem:[#allocation8 + $0x64] sm:$0xf]
    %v1233 = vld [vmem:[#allocation8 + $0x68] sm:$0xf]
    %v1234 = vld [vmem:[#allocation8 + $0x6c] sm:$0xf]
    %v1235 = vld [vmem:[#allocation8 + $0x70] sm:$0xf]
    %v1236 = vld [vmem:[#allocation8 + $0x74] sm:$0xf]
    %v1237 = vld [vmem:[#allocation8 + $0x78] sm:$0xf]
    %v1238 = vld [vmem:[#allocation8 + $0x7c] sm:$0xf]
    %v1239 = vld [vmem:[#allocation8 + $0x80] sm:$0xf]
    %v1240 = vld [vmem:[#allocation8 + $0x84] sm:$0xf]
    %v1241 = vld [vmem:[#allocation8 + $0x88] sm:$0xf]
    %v1242 = vld [vmem:[#allocation8 + $0x8c] sm:$0xf]
    %v1243 = vld [vmem:[#allocation8 + $0x90] sm:$0xf]
    %v1244 = vld [vmem:[#allocation8 + $0x94] sm:$0xf]
    %v1245 = vld [vmem:[#allocation8 + $0x98] sm:$0xf]
    %v1246 = vld [vmem:[#allocation8 + $0x9c] sm:$0xf]
    %v1247 = vld [vmem:[#allocation8 + $0xa0] sm:$0xf]
    %v1248 = vld [vmem:[#allocation8 + $0xa4] sm:$0xf]
    %v1249 = vld [vmem:[#allocation8 + $0xa8] sm:$0xf]
    %v1250 = vld [vmem:[#allocation8 + $0xac] sm:$0xf]
    %v1251 = vld [vmem:[#allocation8 + $0xb0] sm:$0xf]
    %v1252 = vld [vmem:[#allocation8 + $0xb4] sm:$0xf]
    %v1253 = vld [vmem:[#allocation8 + $0xb8] sm:$0xf]
    %v1254 = vld [vmem:[#allocation8 + $0xbc] sm:$0xf]
    %v1255 = vld [vmem:[#allocation8 + $0xc0] sm:$0xf]
    %v1256 = vld [vmem:[#allocation8 + $0xc4] sm:$0xf]
    %v1257 = vld [vmem:[#allocation8 + $0xc8] sm:$0xf]
    %v1258 = vld [vmem:[#allocation8 + $0xcc] sm:$0xf]
    %v1259 = vld [vmem:[#allocation8 + $0xd0] sm:$0xf]
    %v1260 = vld [vmem:[#allocation8 + $0xd4] sm:$0xf]
    %v1261 = vld [vmem:[#allocation8 + $0xd8] sm:$0xf]
    %v1262 = vld [vmem:[#allocation8 + $0xdc] sm:$0xf]
    %v1263 = vld [vmem:[#allocation8 + $0xe0] sm:$0xf]
    %v1264 = vld [vmem:[#allocation8 + $0xe4] sm:$0xf]
    %v1265 = vld [vmem:[#allocation8 + $0xe8] sm:$0xf]
    %v1266 = vld [vmem:[#allocation8 + $0xec] sm:$0xf]
    %v1267 = vld [vmem:[#allocation8 + $0xf0] sm:$0xf]
    %v1268 = vld [vmem:[#allocation8 + $0xf4] sm:$0xf]
    %v1269 = vld [vmem:[#allocation8 + $0xf8] sm:$0xf]
    %v1270 = vld [vmem:[#allocation8 + $0xfc] sm:$0xf]
    %v1272 = vperm.slane %v100, 0
    %v1338 = vunpack.c.l.b16 %v1207
    %v1339 = vunpack.c.l.b16 %v1208
    %v1340 = vunpack.c.l.b16 %v1209
    %v1341 = vunpack.c.l.b16 %v1210
    %v1342 = vunpack.c.l.b16 %v1211
    %v1343 = vunpack.c.l.b16 %v1212
    %v1344 = vunpack.c.l.b16 %v1213
    %v1345 = vunpack.c.l.b16 %v1214
    %v1346 = vunpack.c.l.b16 %v1215
    %v1347 = vunpack.c.l.b16 %v1216
    %v1348 = vunpack.c.l.b16 %v1217
    %v1349 = vunpack.c.l.b16 %v1218
    %v1350 = vunpack.c.l.b16 %v1219
    %v1351 = vunpack.c.l.b16 %v1220
    %v1352 = vunpack.c.l.b16 %v1221
    %v1353 = vunpack.c.l.b16 %v1222
    %v1354 = vunpack.c.l.b16 %v1223
    %v1355 = vunpack.c.l.b16 %v1224
    %v1356 = vunpack.c.l.b16 %v1225
    %v1357 = vunpack.c.l.b16 %v1226
    %v1358 = vunpack.c.l.b16 %v1227
    %v1359 = vunpack.c.l.b16 %v1228
    %v1360 = vunpack.c.l.b16 %v1229
    %v1361 = vunpack.c.l.b16 %v1230
    %v1362 = vunpack.c.l.b16 %v1231
    %v1363 = vunpack.c.l.b16 %v1232
    %v1364 = vunpack.c.l.b16 %v1233
    %v1365 = vunpack.c.l.b16 %v1234
    %v1366 = vunpack.c.l.b16 %v1235
    %v1367 = vunpack.c.l.b16 %v1236
    %v1368 = vunpack.c.l.b16 %v1237
    %v1369 = vunpack.c.l.b16 %v1238
    %v1370 = vunpack.c.l.b16 %v1239
    %v1371 = vunpack.c.l.b16 %v1240
    %v1372 = vunpack.c.l.b16 %v1241
    %v1373 = vunpack.c.l.b16 %v1242
    %v1374 = vunpack.c.l.b16 %v1243
    %v1375 = vunpack.c.l.b16 %v1244
    %v1376 = vunpack.c.l.b16 %v1245
    %v1377 = vunpack.c.l.b16 %v1246
    %v1378 = vunpack.c.l.b16 %v1247
    %v1379 = vunpack.c.l.b16 %v1248
    %v1380 = vunpack.c.l.b16 %v1249
    %v1381 = vunpack.c.l.b16 %v1250
    %v1382 = vunpack.c.l.b16 %v1251
    %v1383 = vunpack.c.l.b16 %v1252
    %v1384 = vunpack.c.l.b16 %v1253
    %v1385 = vunpack.c.l.b16 %v1254
    %v1386 = vunpack.c.l.b16 %v1255
    %v1387 = vunpack.c.l.b16 %v1256
    %v1388 = vunpack.c.l.b16 %v1257
    %v1389 = vunpack.c.l.b16 %v1258
    %v1390 = vunpack.c.l.b16 %v1259
    %v1391 = vunpack.c.l.b16 %v1260
    %v1392 = vunpack.c.l.b16 %v1261
    %v1393 = vunpack.c.l.b16 %v1262
    %v1394 = vunpack.c.l.b16 %v1263
    %v1395 = vunpack.c.l.b16 %v1264
    %v1396 = vunpack.c.l.b16 %v1265
    %v1397 = vunpack.c.l.b16 %v1266
    %v1398 = vunpack.c.l.b16 %v1267
    %v1399 = vunpack.c.l.b16 %v1268
    %v1400 = vunpack.c.l.b16 %v1269
    %v1401 = vunpack.c.l.b16 %v1270
    %v1402 = vpack.c.b16 %v1339, %v1338
    %v1403 = vpack.c.b16 %v1341, %v1340
    %v1404 = vpack.c.b16 %v1343, %v1342
    %v1405 = vpack.c.b16 %v1345, %v1344
    %v1406 = vpack.c.b16 %v1347, %v1346
    %v1407 = vpack.c.b16 %v1349, %v1348
    %v1408 = vpack.c.b16 %v1351, %v1350
    %v1409 = vpack.c.b16 %v1353, %v1352
    %v1410 = vpack.c.b16 %v1355, %v1354
    %v1411 = vpack.c.b16 %v1357, %v1356
    %v1412 = vpack.c.b16 %v1359, %v1358
    %v1413 = vpack.c.b16 %v1361, %v1360
    %v1414 = vpack.c.b16 %v1363, %v1362
    %v1415 = vpack.c.b16 %v1365, %v1364
    %v1416 = vpack.c.b16 %v1367, %v1366
    %v1417 = vpack.c.b16 %v1369, %v1368
    %v1418 = vpack.c.b16 %v1371, %v1370
    %v1419 = vpack.c.b16 %v1373, %v1372
    %v1420 = vpack.c.b16 %v1375, %v1374
    %v1421 = vpack.c.b16 %v1377, %v1376
    %v1422 = vpack.c.b16 %v1379, %v1378
    %v1423 = vpack.c.b16 %v1381, %v1380
    %v1424 = vpack.c.b16 %v1383, %v1382
    %v1425 = vpack.c.b16 %v1385, %v1384
    %v1426 = vpack.c.b16 %v1387, %v1386
    %v1427 = vpack.c.b16 %v1389, %v1388
    %v1428 = vpack.c.b16 %v1391, %v1390
    %v1429 = vpack.c.b16 %v1393, %v1392
    %v1430 = vpack.c.b16 %v1395, %v1394
    %v1431 = vpack.c.b16 %v1397, %v1396
    %v1432 = vpack.c.b16 %v1399, %v1398
    %v1433 = vpack.c.b16 %v1401, %v1400
    %1466 = vmatpush.bf16.msra.mxu0 %v1409
    %1467 = vmatpush.bf16.msra.mxu0 %v1408
    %1468 = vmatpush.bf16.msra.mxu0 %v1407
    %1469 = vmatpush.bf16.msra.mxu0 %v1406
    %1470 = vmatpush.bf16.msra.mxu0 %v1405
    %1471 = vmatpush.bf16.msra.mxu0 %v1404
    %1472 = vmatpush.bf16.msra.mxu0 %v1403
    %1473 = vmatpush.bf16.msra.mxu0 %v1402
    %1474 = vmatmul.bf16.gmra.mxu0 %v1203
    %v1475 = vpop.f32.mrf.mxu0
    %v1476 = vadd.f32 %v1272, %v1475
    %v1477 = vpop.f32.mrf.mxu0
    %1478 = vdwg.mxu0
    %1479 = vmatpush.bf16.msra.mxu0 %v1417
    %1480 = vmatpush.bf16.msra.mxu0 %v1416
    %1481 = vmatpush.bf16.msra.mxu0 %v1415
    %1482 = vmatpush.bf16.msra.mxu0 %v1414
    %1483 = vmatpush.bf16.msra.mxu0 %v1413
    %1484 = vmatpush.bf16.msra.mxu0 %v1412
    %1485 = vmatpush.bf16.msra.mxu0 %v1411
    %1486 = vmatpush.bf16.msra.mxu0 %v1410
    %1487 = vmatmul.bf16.gmra.mxu0 %v1204
    %v1488 = vpop.f32.mrf.mxu0
    %v1489 = vadd.f32 %v1476, %v1488
    %v1490 = vpop.f32.mrf.mxu0
    %1491 = vdwg.mxu0
    %1492 = vmatpush.bf16.msra.mxu0 %v1425
    %1493 = vmatpush.bf16.msra.mxu0 %v1424
    %1494 = vmatpush.bf16.msra.mxu0 %v1423
    %1495 = vmatpush.bf16.msra.mxu0 %v1422
    %1496 = vmatpush.bf16.msra.mxu0 %v1421
    %1497 = vmatpush.bf16.msra.mxu0 %v1420
    %1498 = vmatpush.bf16.msra.mxu0 %v1419
    %1499 = vmatpush.bf16.msra.mxu0 %v1418
    %1500 = vmatmul.bf16.gmra.mxu0 %v1205
    %v1501 = vpop.f32.mrf.mxu0
    %v1502 = vadd.f32 %v1489, %v1501
    %v1503 = vpop.f32.mrf.mxu0
    %1504 = vdwg.mxu0
    %1505 = vmatpush.bf16.msra.mxu0 %v1433
    %1506 = vmatpush.bf16.msra.mxu0 %v1432
    %1507 = vmatpush.bf16.msra.mxu0 %v1431
    %1508 = vmatpush.bf16.msra.mxu0 %v1430
    %1509 = vmatpush.bf16.msra.mxu0 %v1429
    %1510 = vmatpush.bf16.msra.mxu0 %v1428
    %1511 = vmatpush.bf16.msra.mxu0 %v1427
    %1512 = vmatpush.bf16.msra.mxu0 %v1426
    %1513 = vmatmul.bf16.gmra.mxu0 %v1206
    %v1514 = vpop.f32.mrf.mxu0
    %v1515 = vadd.f32 %v1502, %v1514
    %v1516 = vpop.f32.mrf.mxu0
    %1517 = vdwg.mxu0
    %vm1518 = vcmask 58368
    %1519 = vst.msk [vmem:[#allocation11] sm:$0x3] %vm1518, %v1515
    // Predicated region
    $region42: #{tpu_custom_call.1} parent=1 // pred_check
      _
    $region43: #{tpu_custom_call.1} parent=1 // pred_check_branch
      %1521 = sbr.rel (0) target = $region45
    $region44: #{tpu_custom_call.1} parent=1 // pred_region
      %1523 = vsyncadd [#allocation4], 0
      %s1525 = sshll.u32 [#allocation11], 4
      %s1526 = int_to_ptr.vmem [resolvable:$true] %s1525
      %s1527 = sshll.u32 %s5, 4
      %s1528 = int_to_ptr.hbm [resolvable:$true] %s1527
      %1530 = dma.vmem_to_hbm [thread:$0]  %s1526, 32, %s1528, [#allocation4]
    $region45: #{tpu_custom_call.1} parent=1 // pred_fallthru
      _
    // Predicated region
    $region46: #{tpu_custom_call.1} parent=1 // pred_check
      _
    $region47: #{tpu_custom_call.1} parent=1 // pred_check_branch
      %1532 = sbr.rel (0) target = $region49
    $region48: #{tpu_custom_call.1} parent=1 // pred_region
      %1534 = dma.done [#allocation4], 32
    $region49: #{tpu_custom_call.1} parent=1 // pred_fallthru
      _
    %1535 = vsyncpa [#allocation3], 1
    %1536 = vsyncpa [#allocation6], 1
    %1537 = vsyncpa [#allocation9], 1
    %1538 = vsyncpa [#allocation4], 1

</llo_original>
